<compile_context>
chip_gen: v7x
topology: tpu7x:2x2x1
jax: 0.10.0
libtpu: 0.0.40
codegen_flags: <defaults>
</compile_context>

<pallas_src>
from functools import partial

import jax
import jax.numpy as jnp
from jax.experimental import pallas as pl
from jax.experimental.pallas import tpu as pltpu


def feature_block_kernel(istyle_ref, wst_ref, bst_ref, convw_ref,
                         x_ref, prev_ref, o_ref, wmod_ref):
    # Hoisted per-batch work: style Linear + (style + 1) modulation, recomputed only on the
    # first S-tile of each batch and carried in VMEM scratch across the trailing S axis.
    @pl.when(pl.program_id(1) == 0)
    def _():
        style = jnp.dot(istyle_ref[...], wst_ref[...],
                        preferred_element_type=jnp.float32) + bst_ref[...]     # (1, C)
        wmod_ref[...] = convw_ref[...] * (style + 1.0)                          # (F, C)

    # 1x1x1 modulated conv over the flattened-spatial tile == channel matmul on the MXU.
    y = jnp.dot(wmod_ref[...], x_ref[...].astype(jnp.float32),
                preferred_element_type=jnp.float32)                             # (F, TS)

    # x = x + prev_feature, accumulated in f32, cast once on the lane-dense store.
    o_ref[...] = (y + prev_ref[...].astype(jnp.float32)).astype(o_ref.dtype)


@partial(jax.jit, static_argnames=("block_s",), donate_argnums=(1,))
def feature_block(x, prev_feature, istyle, w_style, b_style, conv_w, *, block_s=512):
    """x: (B, C, S) [bf16 ok], prev_feature: (B, F, S) [bf16 ok, donated/aliased into output],
    istyle: (B, L), w_style: (L, C), b_style: (1, C), conv_w: (F, C)."""
    B, C, S = x.shape
    L = istyle.shape[1]
    F = conv_w.shape[0]

    ts = min(block_s, S)
    assert ts % 128 == 0 and S % ts == 0, "S tile must be a multiple of 128 dividing S"

    # Per-batch style row as a (B, 1, L) array so its block equals the full last-two dims.
    istyle3 = istyle.reshape(B, 1, L)

    return pl.pallas_call(
        feature_block_kernel,
        out_shape=jax.ShapeDtypeStruct((B, F, S), prev_feature.dtype),
        grid_spec=pltpu.PrefetchScalarGridSpec(
            num_scalar_prefetch=0,
            grid=(B, S // ts),
            in_specs=[
                pl.BlockSpec((None, 1, L), lambda b, st: (b, 0, 0)),   # istyle row (batch b)
                pl.BlockSpec((L, C), lambda b, st: (0, 0)),            # style Linear weight
                pl.BlockSpec((1, C), lambda b, st: (0, 0)),            # style Linear bias
                pl.BlockSpec((F, C), lambda b, st: (0, 0)),            # Conv3DMod weight
                pl.BlockSpec((None, C, ts), lambda b, st: (b, 0, st)),  # x tile (C, TS)
                pl.BlockSpec((None, F, ts), lambda b, st: (b, 0, st)),  # prev tile (F, TS)
            ],
            out_specs=pl.BlockSpec((None, F, ts), lambda b, st: (b, 0, st)),
            scratch_shapes=[pltpu.VMEM((F, C), jnp.float32)],           # per-batch W_mod carry
        ),
        # out = y + prev is an in-place accumulate: alias prev (input idx 5) with output 0.
        input_output_aliases={5: 0},
        compiler_params=pltpu.CompilerParams(
            # B is independent (megacore-shardable); S carries the W_mod scratch -> arbitrary.
            dimension_semantics=("parallel", "arbitrary")),
    )(istyle3, w_style, b_style, conv_w, x, prev_feature)


if __name__ == "__main__":
    # Small shapes consistent with FeatureBlock(latent_dim=32, input_channel=8,
    # upsample=False, feature_dim=64) on a (B, C, 16, 16, 16) volume.
    # TODO(synk): upsample branch (nn.Upsample trilinear + Blur3d) not implemented;
    # Blur3d is undefined in the reference, so the module is exercised with upsample=False.
    B, C, D, H, W = 2, 8, 16, 16, 16
    L = 32        # latent_dim
    Fd = 64       # feature_dim (out_filters)
    S = D * H * W

    key = jax.random.PRNGKey(0)
    k = jax.random.split(key, 6)

    x5 = jax.random.normal(k[0], (B, C, D, H, W), jnp.float32)
    prev5 = jax.random.normal(k[1], (B, Fd, D, H, W), jnp.float32)
    istyle = jax.random.normal(k[2], (B, L), jnp.float32)

    # nn.Linear(latent_dim, input_channel): deterministic synthetic init.
    w_style = jax.random.normal(k[3], (L, C), jnp.float32) / jnp.sqrt(L)
    b_style = jax.random.normal(k[4], (1, C), jnp.float32) * 0.1

    # Conv3DMod weight (out, in, 1, 1, 1) -> squeezed (out, in),
    # kaiming_normal_(a=0.2, mode='fan_out') scale: gain / sqrt(fan_out).
    gain = jnp.sqrt(2.0 / (1.0 + 0.2 ** 2))
    conv_w = jax.random.normal(k[5], (Fd, C), jnp.float32) * (gain / jnp.sqrt(Fd))

    # Flatten spatial dims to the lane axis; activations in bf16 (kernel is HBM-BW bound).
    x = x5.reshape(B, C, S).astype(jnp.bfloat16)
    prev = prev5.reshape(B, Fd, S).astype(jnp.bfloat16)

    # Pure-JAX f32 reference on the same bf16-quantized activations. Computed BEFORE the
    # kernel call because `prev` is donated / aliased into the kernel output.
    xf = x.astype(jnp.float32)
    pf = prev.astype(jnp.float32)
    style = istyle @ w_style + b_style                                  # (B, C)
    w_mod = conv_w[None, :, :] * (style[:, None, :] + 1.0)              # (B, F, C)
    ref = jnp.einsum('bfc,bcs->bfs', w_mod, xf,
                     precision=jax.lax.Precision.HIGHEST) + pf          # (B, F, S) f32
    ref = jax.block_until_ready(ref)

    out = feature_block(x, prev, istyle, w_style, b_style, conv_w, block_s=512)
    out = jax.block_until_ready(out)
    out5 = out.reshape(B, Fd, D, H, W)   # back to PyTorch NCDHW convention

    assert out.shape == (B, Fd, S) and out5.shape == (B, Fd, D, H, W)
    assert out.dtype == jnp.bfloat16
    # Only the final bf16 store rounds; compare against the f32 reference with bf16 tolerance.
    assert jnp.allclose(out.astype(jnp.float32), ref, atol=5e-2, rtol=5e-2), "mismatch vs reference"

    print("KERNEL_OK")
</pallas_src>

<mosaic_0001>
module attributes {stable_mosaic.version = 11 : i64} {
  func.func @feature_block_kernel(%arg0: i32, %arg1: i32, %arg2: memref<1x1x32xf32, #tpu.memory_space<vmem>>, %arg3: memref<32x8xf32, #tpu.memory_space<vmem>>, %arg4: memref<1x8xf32, #tpu.memory_space<vmem>>, %arg5: memref<64x8xf32, #tpu.memory_space<vmem>>, %arg6: memref<1x8x512xbf16, #tpu.memory_space<vmem>>, %arg7: memref<1x64x512xbf16, #tpu.memory_space<vmem>>, %arg8: memref<1x64x512xbf16, #tpu.memory_space<vmem>>, %arg9: memref<64x8xf32, #tpu.memory_space<vmem>>) attributes {dimension_semantics = [#tpu.dimension_semantics<parallel>, #tpu.dimension_semantics<arbitrary>], iteration_bounds = array<i64: 2, 8>, scalar_prefetch = 0 : i64, scratch_operands = 1 : i64, tpu.core_type = #tpu.core_type<tc>, window_params = [{transform_indices = @transform_0, window_bounds = array<i64: 1, 1, 32>}, {pipeline_mode = #tpu.pipeline_mode<synchronous>, transform_indices = @transform_1, window_bounds = array<i64: 32, 8>}, {pipeline_mode = #tpu.pipeline_mode<synchronous>, transform_indices = @transform_2, window_bounds = array<i64: 1, 8>}, {pipeline_mode = #tpu.pipeline_mode<synchronous>, transform_indices = @transform_3, window_bounds = array<i64: 64, 8>}, {transform_indices = @transform_4, window_bounds = array<i64: 1, 8, 512>}, {transform_indices = @transform_5, window_bounds = array<i64: 1, 64, 512>}, {transform_indices = @transform_6, window_bounds = array<i64: 1, 64, 512>}]} {
    %c0_i32 = arith.constant 0 : i32
    %0 = arith.cmpi eq, %arg1, %c0_i32 : i32
    %1 = arith.extui %0 : i1 to i32
    %c0_i32_0 = arith.constant 0 : i32
    %2 = arith.cmpi ne, %1, %c0_i32_0 : i32
    scf.if %2 {
      %c0_11 = arith.constant 0 : index
      %c0_12 = arith.constant 0 : index
      %c0_13 = arith.constant 0 : index
      %16 = vector.load %arg2[%c0_11, %c0_12, %c0_13] : memref<1x1x32xf32, #tpu.memory_space<vmem>>, vector<1x1x32xf32>
      %17 = vector.shape_cast %16 : vector<1x1x32xf32> to vector<1x32xf32>
      %c0_14 = arith.constant 0 : index
      %c0_15 = arith.constant 0 : index
      %18 = vector.load %arg3[%c0_14, %c0_15] : memref<32x8xf32, #tpu.memory_space<vmem>>, vector<32x8xf32>
      %cst_16 = arith.constant dense<0.000000e+00> : vector<1x8xf32>
      %19 = tpu.matmul %17, %18, %cst_16 {dimension_numbers = #tpu.dot_dimension_numbers<[1], [0], [0], [1], [0, 0, 1, 1], [], []>} : vector<1x32xf32>, vector<32x8xf32>, vector<1x8xf32> -> vector<1x8xf32>
      %c0_17 = arith.constant 0 : index
      %c0_18 = arith.constant 0 : index
      %20 = vector.load %arg4[%c0_17, %c0_18] : memref<1x8xf32, #tpu.memory_space<vmem>>, vector<1x8xf32>
      %21 = arith.addf %19, %20 : vector<1x8xf32>
      %c0_19 = arith.constant 0 : index
      %c0_20 = arith.constant 0 : index
      %22 = vector.load %arg5[%c0_19, %c0_20] : memref<64x8xf32, #tpu.memory_space<vmem>>, vector<64x8xf32>
      %cst_21 = arith.constant 1.000000e+00 : f32
      %23 = vector.broadcast %cst_21 : f32 to vector<1x8xf32>
      %24 = arith.addf %21, %23 : vector<1x8xf32>
      %25 = vector.broadcast %24 : vector<1x8xf32> to vector<64x8xf32>
      %26 = arith.mulf %22, %25 : vector<64x8xf32>
      %c0_22 = arith.constant 0 : index
      %c0_23 = arith.constant 0 : index
      %27 = vector.load %arg9[%c0_22, %c0_23] : memref<64x8xf32, #tpu.memory_space<vmem>>, vector<64x8xf32>
      tpu.vector_store %arg9[%c0_22, %c0_23], %26 {strides = array<i32>} : memref<64x8xf32, #tpu.memory_space<vmem>>, vector<64x8xf32>,
    } else {
    }
    %c0 = arith.constant 0 : index
    %c0_1 = arith.constant 0 : index
    %3 = vector.load %arg9[%c0, %c0_1] : memref<64x8xf32, #tpu.memory_space<vmem>>, vector<64x8xf32>
    %c0_2 = arith.constant 0 : index
    %c0_3 = arith.constant 0 : index
    %c0_4 = arith.constant 0 : index
    %4 = vector.load %arg6[%c0_2, %c0_3, %c0_4] : memref<1x8x512xbf16, #tpu.memory_space<vmem>>, vector<1x8x512xbf16>
    %5 = vector.shape_cast %4 : vector<1x8x512xbf16> to vector<8x512xbf16>
    %6 = arith.extf %5 : vector<8x512xbf16> to vector<8x512xf32>
    %cst = arith.constant dense<0.000000e+00> : vector<64x512xf32>
    %7 = tpu.matmul %3, %6, %cst {dimension_numbers = #tpu.dot_dimension_numbers<[1], [0], [0], [1], [0, 0, 1, 1], [], []>} : vector<64x8xf32>, vector<8x512xf32>, vector<64x512xf32> -> vector<64x512xf32>
    %c0_5 = arith.constant 0 : index
    %c0_6 = arith.constant 0 : index
    %c0_7 = arith.constant 0 : index
    %8 = vector.load %arg7[%c0_5, %c0_6, %c0_7] : memref<1x64x512xbf16, #tpu.memory_space<vmem>>, vector<1x64x512xbf16>
    %9 = vector.shape_cast %8 : vector<1x64x512xbf16> to vector<64x512xbf16>
    %10 = arith.extf %9 : vector<64x512xbf16> to vector<64x512xf32>
    %11 = arith.addf %7, %10 : vector<64x512xf32>
    %12 = arith.truncf %11 : vector<64x512xf32> to vector<64x512xbf16>
    %c0_8 = arith.constant 0 : index
    %c0_9 = arith.constant 0 : index
    %c0_10 = arith.constant 0 : index
    %13 = vector.load %arg8[%c0_8, %c0_9, %c0_10] : memref<1x64x512xbf16, #tpu.memory_space<vmem>>, vector<1x64x512xbf16>
    %14 = vector.shape_cast %13 : vector<1x64x512xbf16> to vector<64x512xbf16>
    %15 = vector.shape_cast %12 : vector<64x512xbf16> to vector<1x64x512xbf16>
    tpu.vector_store %arg8[%c0_8, %c0_9, %c0_10], %15 {strides = array<i32>} : memref<1x64x512xbf16, #tpu.memory_space<vmem>>, vector<1x64x512xbf16>,
    return
  }
  func.func @transform_0(%arg0: i32, %arg1: i32) -> (i32, i32, i32) {
    %c0_i32 = arith.constant 0 : i32
    %c0_i32_0 = arith.constant 0 : i32
    %c0_i32_1 = arith.constant 0 : i32
    return %arg0, %c0_i32, %c0_i32_0 : i32, i32, i32
  }
  func.func @transform_1(%arg0: i32, %arg1: i32) -> (i32, i32) {
    %c0_i32 = arith.constant 0 : i32
    %c0_i32_0 = arith.constant 0 : i32
    %c0_i32_1 = arith.constant 0 : i32
    return %c0_i32, %c0_i32_0 : i32, i32
  }
  func.func @transform_2(%arg0: i32, %arg1: i32) -> (i32, i32) {
    %c0_i32 = arith.constant 0 : i32
    %c0_i32_0 = arith.constant 0 : i32
    %c0_i32_1 = arith.constant 0 : i32
    return %c0_i32, %c0_i32_0 : i32, i32
  }
  func.func @transform_3(%arg0: i32, %arg1: i32) -> (i32, i32) {
    %c0_i32 = arith.constant 0 : i32
    %c0_i32_0 = arith.constant 0 : i32
    %c0_i32_1 = arith.constant 0 : i32
    return %c0_i32, %c0_i32_0 : i32, i32
  }
  func.func @transform_4(%arg0: i32, %arg1: i32) -> (i32, i32, i32) {
    %c0_i32 = arith.constant 0 : i32
    %c0_i32_0 = arith.constant 0 : i32
    return %arg0, %c0_i32, %arg1 : i32, i32, i32
  }
  func.func @transform_5(%arg0: i32, %arg1: i32) -> (i32, i32, i32) {
    %c0_i32 = arith.constant 0 : i32
    %c0_i32_0 = arith.constant 0 : i32
    return %arg0, %c0_i32, %arg1 : i32, i32, i32
  }
  func.func @transform_6(%arg0: i32, %arg1: i32) -> (i32, i32, i32) {
    %c0_i32 = arith.constant 0 : i32
    %c0_i32_0 = arith.constant 0 : i32
    return %arg0, %c0_i32, %arg1 : i32, i32, i32
  }
}

</mosaic_0001>

<llo_original>
// kernel: feature_block.1
$region0: #{feature_block.1}
  #allocation0 [shape = 'u32[]', space=smem, size = 0x4, offset = 0x4, fixed_abs, tag = 'smem constant byte address 0x4 - core index']
  #allocation1 [shape = 'u32[144,128]{1,0:T(1,128)}', space=vmem, size = 0x12000, scoped, tag = 'internal scratch']
  #allocation2 [shape = 'f32[64,8]{1,0:T(8,128)}', space=vmem, size = 0x8000, scoped, tag = 'scratch operand']
  %s0 = inlined_call_operand.vmem [shape: f32[2,1,32], index: 0, kind: input, shape index: {}]
  %s1 = inlined_call_operand.vmem [shape: f32[32,8], index: 1, kind: input, shape index: {}]
  %s2 = inlined_call_operand.vmem [shape: f32[1,8], index: 2, kind: input, shape index: {}]
  %s3 = inlined_call_operand.vmem [shape: f32[64,8], index: 3, kind: input, shape index: {}]
  %s4 = inlined_call_operand.hbm [shape: bf16[2,8,4096], index: 4, kind: input, shape index: {}]
  %s5 = inlined_call_operand.hbm [shape: bf16[2,64,4096], index: 5, kind: input, shape index: {}, may-alias: {5,6}]
  %s6 = inlined_call_operand.hbm [shape: bf16[2,64,4096], index: 6, kind: output, shape index: {}, may-alias: {5,6}]
  %s7 = sld [smem:[#allocation0]]
  $region69: #{feature_block.1} parent=0
    _
  %s9 = ssub.s32 1, %s7
  %s10 = scalar_select 0, %s9, %s7
  $region1: #{feature_block.1} parent=0
    #allocation3 [shape = 'u8[16384]{0}', space=vmem, size = 0x4000, scoped, tag = 'input window, operand 4']
    #allocation4 [shape = 's32[2]{0}', space=sflag, size = 0x8, scoped, tag = 'scoped memory for feature_block.1']
    #allocation5 [shape = 's32[2]{0}', space=sflag, size = 0x8, scoped, tag = 'scoped memory for feature_block.1']
    #allocation6 [shape = 'u8[131072]{0}', space=vmem, size = 0x20000, scoped, tag = 'input window, operand 5']
    #allocation7 [shape = 's32[2]{0}', space=sflag, size = 0x8, scoped, tag = 'scoped memory for feature_block.1']
    #allocation8 [shape = 'u8[131072]{0}', space=vmem, size = 0x20000, scoped, tag = 'output window, operand 0']
    %11 = vsyncpa [#allocation4], 0
    %s12 = scalar_lea.sflag [#allocation4], 1
    %13 = vsyncpa %s12, 0
    %14 = vsyncpa [#allocation7], 0
    %s15 = scalar_lea.sflag [#allocation7], 1
    %16 = vsyncpa %s15, 0
    %17 = vsyncpa [#allocation5], 0
    %s18 = scalar_lea.sflag [#allocation5], 1
    %19 = vsyncpa %s18, 0
    loop: start=0, step=1, limit=18
    $region2: #{feature_block.1} parent=1 // loop_pre_header
      _
    $region3: #{feature_block.1} parent=1 // loop_header
      %s21 = sphi 0, %s25
      %p22 = scmp.ge.s32.totalorder %s21, 18
      %s28 = sphi 0, %s40
      %s29 = sphi 0, %s36
      %s30 = sphi 0, %s28
      %s31 = sphi 0, %s29
      %s32 = sphi 0, %s30
      %s33 = sphi 0, %s31
      %s43 = sphi 0, %s45
      %s46 = sphi 0, %s43
      %s47 = sphi 0, %s46
      %s63 = sphi 0, %s47
      %s67 = sphi 0, %s67
      %s69 = sphi 0, %s67
      %s70 = sphi 0, %s69
      %s84 = sphi 0, %s70
      %s88 = sphi 0, %s88
      %s90 = sphi 0, %s88
      %s91 = sphi 0, %s90
      %s105 = sphi 0, %s91
      %s109 = sphi 0, %s109
      %s111 = sphi 0, %s109
      %s112 = sphi 0, %s111
      %s126 = sphi 0, %s112
      %s134 = sphi 0, %s136
      %s137 = sphi 0, %s134
      %s138 = sphi 0, %s137
      %s154 = sphi 0, %s138
      %s162 = sphi 0, %s164
      %s165 = sphi 0, %s162
      %s166 = sphi 0, %s165
      %s182 = sphi 0, %s166
      %s190 = sphi 0, %s192
      %s193 = sphi 0, %s190
      %s194 = sphi 0, %s193
      %s210 = sphi 0, %s194
    $region4: #{feature_block.1} parent=1 // loop_header_branch
      %24 = sbr.rel (%p22) target = $region8
    $region5: #{feature_block.1} parent=1 // loop_body
      %s26 = ssub.s32 %s21, 1
      %s27 = ssub.s32 %s21, 2
      %s34 = sadd.s32 1, %s29
      %p35 = scmp.ge.s32.totalorder %s34, 8
      %s36 = scalar_select %p35, 0, %s34
      %s37 = sadd.s32 1, %s28
      %s38 = scalar_select %p35, %s37, %s28
      %p39 = scmp.ge.s32.totalorder %s38, 2
      %s40 = scalar_select %p39, 0, %s38
      %s41 = ssub.s32 %s28, %s40
      %p42 = scmp.eq.s32.totalorder %s41, 0
      %s44 = sadd.s32 %s43, 1
      %s45 = scalar_select %p42, %s43, %s44
      %p48 = pneg %p42
      %p49 = scmp.eq.s32.totalorder %s21, 15
      %p50 = por %p48, %p49
      %p51 = scmp.ne.s32.totalorder %s43, %s46
      %p52 = scmp.eq.s32.totalorder %s21, 0
      %p53 = por %p51, %p52
      %p54 = scmp.ne.s32.totalorder %s43, %s46
      %p55 = scmp.eq.s32.totalorder %s26, 15
      %p56 = por %p54, %p55
      %p57 = scmp.ne.s32.totalorder %s46, %s47
      %p58 = scmp.eq.s32.totalorder %s26, 0
      %p59 = por %p57, %p58
      %p60 = scmp.ne.s32.totalorder %s46, %s47
      %p61 = scmp.eq.s32.totalorder %s27, 15
      %p62 = por %p60, %p61
      %p64 = scmp.ne.s32.totalorder %s47, %s63
      %p65 = scmp.eq.s32.totalorder %s27, 0
      %p66 = por %p64, %p65
      %s68 = sadd.s32 %s67, 1
      %p71 = scmp.eq.s32.totalorder %s21, 15
      %p72 = scmp.ne.s32.totalorder %s67, %s69
      %p73 = scmp.eq.s32.totalorder %s21, 0
      %p74 = por %p72, %p73
      %p75 = scmp.ne.s32.totalorder %s67, %s69
      %p76 = scmp.eq.s32.totalorder %s26, 15
      %p77 = por %p75, %p76
      %p78 = scmp.ne.s32.totalorder %s69, %s70
      %p79 = scmp.eq.s32.totalorder %s26, 0
      %p80 = por %p78, %p79
      %p81 = scmp.ne.s32.totalorder %s69, %s70
      %p82 = scmp.eq.s32.totalorder %s27, 15
      %p83 = por %p81, %p82
      %p85 = scmp.ne.s32.totalorder %s70, %s84
      %p86 = scmp.eq.s32.totalorder %s27, 0
      %p87 = por %p85, %p86
      %s89 = sadd.s32 %s88, 1
      %p92 = scmp.eq.s32.totalorder %s21, 15
      %p93 = scmp.ne.s32.totalorder %s88, %s90
      %p94 = scmp.eq.s32.totalorder %s21, 0
      %p95 = por %p93, %p94
      %p96 = scmp.ne.s32.totalorder %s88, %s90
      %p97 = scmp.eq.s32.totalorder %s26, 15
      %p98 = por %p96, %p97
      %p99 = scmp.ne.s32.totalorder %s90, %s91
      %p100 = scmp.eq.s32.totalorder %s26, 0
      %p101 = por %p99, %p100
      %p102 = scmp.ne.s32.totalorder %s90, %s91
      %p103 = scmp.eq.s32.totalorder %s27, 15
      %p104 = por %p102, %p103
      %p106 = scmp.ne.s32.totalorder %s91, %s105
      %p107 = scmp.eq.s32.totalorder %s27, 0
      %p108 = por %p106, %p107
      %s110 = sadd.s32 %s109, 1
      %p113 = scmp.eq.s32.totalorder %s21, 15
      %p114 = scmp.ne.s32.totalorder %s109, %s111
      %p115 = scmp.eq.s32.totalorder %s21, 0
      %p116 = por %p114, %p115
      %p117 = scmp.ne.s32.totalorder %s109, %s111
      %p118 = scmp.eq.s32.totalorder %s26, 15
      %p119 = por %p117, %p118
      %p120 = scmp.ne.s32.totalorder %s111, %s112
      %p121 = scmp.eq.s32.totalorder %s26, 0
      %p122 = por %p120, %p121
      %p123 = scmp.ne.s32.totalorder %s111, %s112
      %p124 = scmp.eq.s32.totalorder %s27, 15
      %p125 = por %p123, %p124
      %p127 = scmp.ne.s32.totalorder %s112, %s126
      %p128 = scmp.eq.s32.totalorder %s27, 0
      %p129 = por %p127, %p128
      %s130 = ssub.s32 %s28, %s40
      %s131 = ssub.s32 %s29, %s36
      %s132 = sor.u32 %s130, %s131
      %p133 = scmp.eq.s32.totalorder %s132, 0
      %s135 = sadd.s32 %s134, 1
      %s136 = scalar_select %p133, %s134, %s135
      %p139 = pneg %p133
      %p140 = scmp.eq.s32.totalorder %s21, 15
      %p141 = por %p139, %p140
      %p142 = scmp.ne.s32.totalorder %s134, %s137
      %p143 = scmp.eq.s32.totalorder %s21, 0
      %p144 = por %p142, %p143
      %p145 = scmp.ne.s32.totalorder %s134, %s137
      %p146 = scmp.eq.s32.totalorder %s26, 15
      %p147 = por %p145, %p146
      %p148 = scmp.ne.s32.totalorder %s137, %s138
      %p149 = scmp.eq.s32.totalorder %s26, 0
      %p150 = por %p148, %p149
      %p151 = scmp.ne.s32.totalorder %s137, %s138
      %p152 = scmp.eq.s32.totalorder %s27, 15
      %p153 = por %p151, %p152
      %p155 = scmp.ne.s32.totalorder %s138, %s154
      %p156 = scmp.eq.s32.totalorder %s27, 0
      %p157 = por %p155, %p156
      %s158 = ssub.s32 %s28, %s40
      %s159 = ssub.s32 %s29, %s36
      %s160 = sor.u32 %s158, %s159
      %p161 = scmp.eq.s32.totalorder %s160, 0
      %s163 = sadd.s32 %s162, 1
      %s164 = scalar_select %p161, %s162, %s163
      %p167 = pneg %p161
      %p168 = scmp.eq.s32.totalorder %s21, 15
      %p169 = por %p167, %p168
      %p170 = scmp.ne.s32.totalorder %s162, %s165
      %p171 = scmp.eq.s32.totalorder %s21, 0
      %p172 = por %p170, %p171
      %p173 = scmp.ne.s32.totalorder %s162, %s165
      %p174 = scmp.eq.s32.totalorder %s26, 15
      %p175 = por %p173, %p174
      %p176 = scmp.ne.s32.totalorder %s165, %s166
      %p177 = scmp.eq.s32.totalorder %s26, 0
      %p178 = por %p176, %p177
      %p179 = scmp.ne.s32.totalorder %s165, %s166
      %p180 = scmp.eq.s32.totalorder %s27, 15
      %p181 = por %p179, %p180
      %p183 = scmp.ne.s32.totalorder %s166, %s182
      %p184 = scmp.eq.s32.totalorder %s27, 0
      %p185 = por %p183, %p184
      %s186 = ssub.s32 %s28, %s40
      %s187 = ssub.s32 %s29, %s36
      %s188 = sor.u32 %s186, %s187
      %p189 = scmp.eq.s32.totalorder %s188, 0
      %s191 = sadd.s32 %s190, 1
      %s192 = scalar_select %p189, %s190, %s191
      %p195 = pneg %p189
      %p196 = scmp.eq.s32.totalorder %s21, 15
      %p197 = por %p195, %p196
      %p198 = scmp.ne.s32.totalorder %s190, %s193
      %p199 = scmp.eq.s32.totalorder %s21, 0
      %p200 = por %p198, %p199
      %p201 = scmp.ne.s32.totalorder %s190, %s193
      %p202 = scmp.eq.s32.totalorder %s26, 15
      %p203 = por %p201, %p202
      %p204 = scmp.ne.s32.totalorder %s193, %s194
      %p205 = scmp.eq.s32.totalorder %s26, 0
      %p206 = por %p204, %p205
      %p207 = scmp.ne.s32.totalorder %s193, %s194
      %p208 = scmp.eq.s32.totalorder %s27, 15
      %p209 = por %p207, %p208
      %p211 = scmp.ne.s32.totalorder %s194, %s210
      %p212 = scmp.eq.s32.totalorder %s27, 0
      %p213 = por %p211, %p212
      %p214 = scmp.le.s32.totalorder 1, %s21
      %p215 = scmp.lt.s32.totalorder %s21, 17
      %p216 = pnand %p214, %p215
      %p217 = pneg %p216
      // Predicated region
      $region9: #{feature_block.1} parent=5 // pred_check
        _
      $region10: #{feature_block.1} parent=5 // pred_check_branch
        %219 = sbr.rel (%p216) target = $region12
      $region11: #{feature_block.1} parent=5 // pred_region
        %s220 = ssub.s32 %s21, 1
        // Predicated region
        $region13: #{feature_block.1} parent=11 // pred_check
          %p221 = pneg %p80
        $region14: #{feature_block.1} parent=11 // pred_check_branch
          %223 = sbr.rel (%p221) target = $region16
        $region15: #{feature_block.1} parent=11 // pred_region
          _
        $region16: #{feature_block.1} parent=11 // pred_fallthru
          _
        // Predicated region
        $region17: #{feature_block.1} parent=11 // pred_check
          %p224 = pneg %p101
        $region18: #{feature_block.1} parent=11 // pred_check_branch
          %226 = sbr.rel (%p224) target = $region20
        $region19: #{feature_block.1} parent=11 // pred_region
          _
        $region20: #{feature_block.1} parent=11 // pred_fallthru
          _
        // Predicated region
        $region21: #{feature_block.1} parent=11 // pred_check
          %p227 = pneg %p122
        $region22: #{feature_block.1} parent=11 // pred_check_branch
          %229 = sbr.rel (%p227) target = $region24
        $region23: #{feature_block.1} parent=11 // pred_region
          _
        $region24: #{feature_block.1} parent=11 // pred_fallthru
          _
      $region12: #{feature_block.1} parent=5 // pred_fallthru
        _
      %p230 = scmp.lt.s32.totalorder %s21, 16
      // Predicated region
      $region25: #{feature_block.1} parent=5 // pred_check
        %p231 = pneg %p230
      $region26: #{feature_block.1} parent=5 // pred_check_branch
        %233 = sbr.rel (%p231) target = $region28
      $region27: #{feature_block.1} parent=5 // pred_region
        // Predicated region
        $region29: #{feature_block.1} parent=27 // pred_check
          %p234 = pneg %p53
        $region30: #{feature_block.1} parent=27 // pred_check_branch
          %236 = sbr.rel (%p234) target = $region32
        $region31: #{feature_block.1} parent=27 // pred_region
          %p237 = scmp.lt.s32.totalorder %s28, 1
          %s238 = scalar_select %p237, %s28, 1
          %s239 = scalar_lea.vmem %s0, %s238
        $region32: #{feature_block.1} parent=27 // pred_fallthru
          _
        // Predicated region
        $region33: #{feature_block.1} parent=27 // pred_check
          %p240 = pneg %p144
        $region34: #{feature_block.1} parent=27 // pred_check_branch
          %242 = sbr.rel (%p240) target = $region36
        $region35: #{feature_block.1} parent=27 // pred_region
          %s243 = sand.u32 %s134, 1
          %s244 = scalar_lea.sflag [#allocation4], %s243
          %s245 = sand.u32 %s134, 1
          %s246 = smul.addr %s245, 16
          %s247 = scalar_lea.vmem [#allocation3], %s246
          %s248 = smul.u32 4, %s29
          %s250 = ssub.s32 256, 256
          %251 = vsyncadd %s244, %s250
          %s252 = smul.addr %s28, 32
          %s253 = sadd.s32 %s248, %s252
          %s254 = smul.addr %s253, 64
          %s255 = scalar_lea.hbm %s4, %s254
          %s257 = sshll.u32 %s247, 4
          %s258 = int_to_ptr.vmem [resolvable:$true] %s257
          %260 = dma.hbm_to_vmem [thread:$0]  %s255, 256, %s258, %s244
        $region36: #{feature_block.1} parent=27 // pred_fallthru
          _
        // Predicated region
        $region37: #{feature_block.1} parent=27 // pred_check
          %p261 = pneg %p172
        $region38: #{feature_block.1} parent=27 // pred_check_branch
          %263 = sbr.rel (%p261) target = $region40
        $region39: #{feature_block.1} parent=27 // pred_region
          %s264 = sand.u32 %s162, 1
          %s265 = scalar_lea.sflag [#allocation7], %s264
          %s266 = sand.u32 %s162, 1
          %s267 = smul.addr %s266, 128
          %s268 = scalar_lea.vmem [#allocation6], %s267
          %s269 = smul.u32 4, %s29
          %s271 = ssub.s32 2048, 2048
          %272 = vsyncadd %s265, %s271
          %s273 = smul.addr %s28, 256
          %s274 = sadd.s32 %s269, %s273
          %s275 = smul.addr %s274, 64
          %s276 = scalar_lea.hbm %s5, %s275
          %s277 = sshll.u32 %s268, 4
          %s278 = int_to_ptr.vmem [resolvable:$true] %s277
          %283 = dma.hbm_to_vmem [thread:$0]  %s276, 2048, %s278, %s265, 2048, 256, 16
        $region40: #{feature_block.1} parent=27 // pred_fallthru
          _
      $region28: #{feature_block.1} parent=5 // pred_fallthru
        _
      %p284 = scmp.le.s32.totalorder 1, %s21
      %p285 = scmp.lt.s32.totalorder %s21, 17
      %p286 = pnand %p284, %p285
      %p287 = pneg %p286
      // Predicated region
      $region41: #{feature_block.1} parent=5 // pred_check
        _
      $region42: #{feature_block.1} parent=5 // pred_check_branch
        %289 = sbr.rel (%p286) target = $region44
      $region43: #{feature_block.1} parent=5 // pred_region
        %s290 = ssub.s32 %s21, 1
        %s291 = sand.u32 %s137, 1
        %s292 = scalar_lea.sflag [#allocation4], %s291
        %s293 = sand.u32 %s137, 1
        %s294 = smul.addr %s293, 16
        %s295 = scalar_lea.vmem [#allocation3], %s294
        // Predicated region
        $region45: #{feature_block.1} parent=43 // pred_check
          %p296 = pneg %p150
        $region46: #{feature_block.1} parent=43 // pred_check_branch
          %298 = sbr.rel (%p296) target = $region48
        $region47: #{feature_block.1} parent=43 // pred_region
          %299 = dma.done %s292, 256
        $region48: #{feature_block.1} parent=43 // pred_fallthru
          _
        %s300 = sand.u32 %s165, 1
        %s301 = scalar_lea.sflag [#allocation7], %s300
        %s302 = sand.u32 %s165, 1
        %s303 = smul.addr %s302, 128
        %s304 = scalar_lea.vmem [#allocation6], %s303
        // Predicated region
        $region49: #{feature_block.1} parent=43 // pred_check
          %p305 = pneg %p178
        $region50: #{feature_block.1} parent=43 // pred_check_branch
          %307 = sbr.rel (%p305) target = $region52
        $region51: #{feature_block.1} parent=43 // pred_region
          %308 = dma.done %s301, 2048
        $region52: #{feature_block.1} parent=43 // pred_fallthru
          _
        %p309 = scmp.lt.s32.totalorder %s30, 1
        %s310 = scalar_select %p309, %s30, 1
        %s311 = scalar_lea.vmem %s0, %s310
        %p312 = pneg %p59
        %p313 = pneg %p56
        %p314 = pneg %p80
        %p315 = pneg %p77
        %p316 = pneg %p101
        %p317 = pneg %p98
        %p318 = pneg %p122
        %p319 = pneg %p119
        %s320 = sand.u32 %s137, 1
        %s321 = scalar_lea.sflag [#allocation4], %s320
        %s322 = sand.u32 %s137, 1
        %s323 = smul.addr %s322, 16
        %s324 = scalar_lea.vmem [#allocation3], %s323
        %p325 = pneg %p150
        %p326 = pneg %p147
        %s327 = sand.u32 %s165, 1
        %s328 = scalar_lea.sflag [#allocation7], %s327
        %s329 = sand.u32 %s165, 1
        %s330 = smul.addr %s329, 128
        %s331 = scalar_lea.vmem [#allocation6], %s330
        %p332 = pneg %p178
        %p333 = pneg %p175
        %p334 = pneg %p206
        %p335 = pneg %p203
        %s336 = sand.u32 %s193, 1
        %s337 = scalar_lea.sflag [#allocation5], %s336
        %s338 = sand.u32 %s193, 1
        %s339 = smul.addr %s338, 128
        %s340 = scalar_lea.vmem [#allocation8], %s339
        %p341 = scmp.lt.s32.totalorder %s30, 1
        %s342 = scalar_select %p341, %s30, 1
        %s343 = scalar_lea.vmem %s0, %s342
        %s344 = smul.u32 4, %s31
        %s345 = smul.u32 4, %s31
        %s346 = smul.u32 4, %s31
        %p347 = scmp.eq.s32.totalorder %s31, 0
        // Predicated region
        $region53: #{feature_block.1} parent=43 // pred_check
          %p348 = pneg %p347
        $region54: #{feature_block.1} parent=43 // pred_check_branch
          %350 = sbr.rel (%p348) target = $region56
        $region55: #{feature_block.1} parent=43 // pred_region
          %v351 = vld [vmem:[%s343] sm:$0x1]
          %v352 = vld [vmem:[%s1] sm:$0xff]
          %v353 = vld [vmem:[%s1 + $0x8] sm:$0xff]
          %v354 = vld [vmem:[%s1 + $0x10] sm:$0xff]
          %v355 = vld [vmem:[%s1 + $0x18] sm:$0xff]
          %v356 = vld [vmem:[%s2] sm:$0x1]
          %vm357 = vcmask 261120
          %v359 = vsel %vm357, %v351, 0
          %361 = vmatprep.subr.mxu0 0.0
          %362 = vmatpush1.msra.mxu0 %v352
          %363 = vmatprep.subr.mxu0 0.0
          %364 = vmatpush1.msra.mxu0 %v353
          %365 = vmatprep.subr.mxu0 0.0
          %366 = vmatpush1.msra.mxu0 %v354
          %367 = vmatprep.subr.mxu0 0.0
          %368 = vmatpush1.msra.mxu0 %v355
          %369 = vmatprep.subr.mxu0 0.0
          %370 = vmatpush1.msra.mxu0 0.0
          %371 = vmatprep.subr.mxu0 0.0
          %372 = vmatpush1.msra.mxu0 0.0
          %373 = vmatprep.subr.mxu0 0.0
          %374 = vmatpush1.msra.mxu0 0.0
          %375 = vmatprep.subr.mxu0 0.0
          %376 = vmatpush1.msra.mxu0 0.0
          %377 = vmatprep.subr.mxu0 0.0
          %378 = vmatpush1.msra.mxu0 0.0
          %379 = vmatprep.subr.mxu0 0.0
          %380 = vmatpush1.msra.mxu0 0.0
          %381 = vmatprep.subr.mxu0 0.0
          %382 = vmatpush1.msra.mxu0 0.0
          %383 = vmatprep.subr.mxu0 0.0
          %384 = vmatpush1.msra.mxu0 0.0
          %385 = vmatprep.subr.mxu0 0.0
          %386 = vmatpush1.msra.mxu0 0.0
          %387 = vmatprep.subr.mxu0 0.0
          %388 = vmatpush1.msra.mxu0 0.0
          %389 = vmatprep.subr.mxu0 0.0
          %390 = vmatpush1.msra.mxu0 0.0
          %391 = vmatprep.subr.mxu0 0.0
          %392 = vmatpush1.msra.mxu0 0.0
          %393 = vmatprep.subr.mxu0 0.0
          %394 = vmatpush1.msra.mxu0 0.0
          %395 = vmatprep.subr.mxu0 0.0
          %396 = vmatpush1.msra.mxu0 0.0
          %397 = vmatprep.subr.mxu0 0.0
          %398 = vmatpush1.msra.mxu0 0.0
          %399 = vmatprep.subr.mxu0 0.0
          %400 = vmatpush1.msra.mxu0 0.0
          %401 = vmatprep.subr.mxu0 0.0
          %402 = vmatpush1.msra.mxu0 0.0
          %403 = vmatprep.subr.mxu0 0.0
          %404 = vmatpush1.msra.mxu0 0.0
          %405 = vmatprep.subr.mxu0 0.0
          %406 = vmatpush1.msra.mxu0 0.0
          %407 = vmatprep.subr.mxu0 0.0
          %408 = vmatpush1.msra.mxu0 0.0
          %409 = vmatprep.subr.mxu0 0.0
          %410 = vmatpush1.msra.mxu0 0.0
          %411 = vmatprep.subr.mxu0 0.0
          %412 = vmatpush1.msra.mxu0 0.0
          %413 = vmatprep.subr.mxu0 0.0
          %414 = vmatpush1.msra.mxu0 0.0
          %415 = vmatprep.subr.mxu0 0.0
          %416 = vmatpush1.msra.mxu0 0.0
          %417 = vmatprep.subr.mxu0 0.0
          %418 = vmatpush1.msra.mxu0 0.0
          %419 = vmatprep.subr.mxu0 0.0
          %420 = vmatpush1.msra.mxu0 0.0
          %421 = vmatprep.subr.mxu0 0.0
          %422 = vmatpush1.msra.mxu0 0.0
          %423 = vmatprep.subr.mxu0 0.0
          %424 = vmatpush1.msra.mxu0 0.0
          %425 = vmatprep.mubr.f32.mxu0 0.0
          %426 = vmatmul.mubr.f32.gmra.mrb[0].mxu0 %v359
          %v427 = vpop.f32.mrb[0].mxu0
          %v428 = vadd.f32 %v356, %v427
          %v429 = vpop.f32.mrb[0].mxu0
          %430 = vdwg.mxu0
          %v431 = vld [vmem:[%s3] sm:$0xff]
          %v432 = vld [vmem:[%s3 + $0x8] sm:$0xff]
          %v433 = vld [vmem:[%s3 + $0x10] sm:$0xff]
          %v434 = vld [vmem:[%s3 + $0x18] sm:$0xff]
          %v435 = vld [vmem:[%s3 + $0x20] sm:$0xff]
          %v436 = vld [vmem:[%s3 + $0x28] sm:$0xff]
          %v437 = vld [vmem:[%s3 + $0x30] sm:$0xff]
          %v438 = vld [vmem:[%s3 + $0x38] sm:$0xff]
          %v439 = vadd.f32 %v428, 1.0
          %v440 = vlaneseq
          %v441 = vshrl.u32 %v440, 7
          %v442 = vsub.s32 0, %v441
          %v443 = vrot.slane %v439, %v442
          %v444 = vmul.f32 %v431, %v443
          %v445 = vmul.f32 %v432, %v443
          %v446 = vmul.f32 %v433, %v443
          %v447 = vmul.f32 %v434, %v443
          %v448 = vmul.f32 %v435, %v443
          %v449 = vmul.f32 %v436, %v443
          %v450 = vmul.f32 %v437, %v443
          %v451 = vmul.f32 %v438, %v443
          %vm452 = vcmask 64512
          %453 = vst.msk [vmem:[#allocation2] sm:$0xff] %vm452, %v444
          %454 = vst.msk [vmem:[#allocation2 + $0x8] sm:$0xff] %vm452, %v445
          %455 = vst.msk [vmem:[#allocation2 + $0x10] sm:$0xff] %vm452, %v446
          %456 = vst.msk [vmem:[#allocation2 + $0x18] sm:$0xff] %vm452, %v447
          %457 = vst.msk [vmem:[#allocation2 + $0x20] sm:$0xff] %vm452, %v448
          %458 = vst.msk [vmem:[#allocation2 + $0x28] sm:$0xff] %vm452, %v449
          %459 = vst.msk [vmem:[#allocation2 + $0x30] sm:$0xff] %vm452, %v450
          %460 = vst.msk [vmem:[#allocation2 + $0x38] sm:$0xff] %vm452, %v451
        $region56: #{feature_block.1} parent=43 // pred_fallthru
          _
        %v461 = vld [vmem:[#allocation2] sm:$0xff]
        %v462 = vld [vmem:[#allocation2 + $0x8] sm:$0xff]
        %v463 = vld [vmem:[#allocation2 + $0x10] sm:$0xff]
        %v464 = vld [vmem:[#allocation2 + $0x18] sm:$0xff]
        %v465 = vld [vmem:[#allocation2 + $0x20] sm:$0xff]
        %v466 = vld [vmem:[#allocation2 + $0x28] sm:$0xff]
        %v467 = vld [vmem:[#allocation2 + $0x30] sm:$0xff]
        %v468 = vld [vmem:[#allocation2 + $0x38] sm:$0xff]
        %v469 = vld [vmem:[%s295] sm:$0xff]
        %v470 = vld [vmem:[%s295 + $0x8] sm:$0xff]
        %v471 = vunpack.c.l.bf16 %v469
        %v472 = vunpack.c.h.bf16 %v469
        %v473 = vunpack.c.l.bf16 %v470
        %v474 = vunpack.c.h.bf16 %v470
        %v475 = vld [vmem:[%s304] sm:$0xff]
        %v476 = vld [vmem:[%s304 + $0x8] sm:$0xff]
        %v477 = vld [vmem:[%s304 + $0x10] sm:$0xff]
        %v478 = vld [vmem:[%s304 + $0x18] sm:$0xff]
        %v479 = vld [vmem:[%s304 + $0x20] sm:$0xff]
        %v480 = vld [vmem:[%s304 + $0x28] sm:$0xff]
        %v481 = vld [vmem:[%s304 + $0x30] sm:$0xff]
        %v482 = vld [vmem:[%s304 + $0x38] sm:$0xff]
        %v483 = vld [vmem:[%s304 + $0x40] sm:$0xff]
        %v484 = vld [vmem:[%s304 + $0x48] sm:$0xff]
        %v485 = vld [vmem:[%s304 + $0x50] sm:$0xff]
        %v486 = vld [vmem:[%s304 + $0x58] sm:$0xff]
        %v487 = vld [vmem:[%s304 + $0x60] sm:$0xff]
        %v488 = vld [vmem:[%s304 + $0x68] sm:$0xff]
        %v489 = vld [vmem:[%s304 + $0x70] sm:$0xff]
        %v490 = vld [vmem:[%s304 + $0x78] sm:$0xff]
        %v491 = vunpack.c.l.bf16 %v475
        %v492 = vunpack.c.h.bf16 %v475
        %v493 = vunpack.c.l.bf16 %v476
        %v494 = vunpack.c.h.bf16 %v476
        %v495 = vunpack.c.l.bf16 %v477
        %v496 = vunpack.c.h.bf16 %v477
        %v497 = vunpack.c.l.bf16 %v478
        %v498 = vunpack.c.h.bf16 %v478
        %v499 = vunpack.c.l.bf16 %v479
        %v500 = vunpack.c.h.bf16 %v479
        %v501 = vunpack.c.l.bf16 %v480
        %v502 = vunpack.c.h.bf16 %v480
        %v503 = vunpack.c.l.bf16 %v481
        %v504 = vunpack.c.h.bf16 %v481
        %v505 = vunpack.c.l.bf16 %v482
        %v506 = vunpack.c.h.bf16 %v482
        %v507 = vunpack.c.l.bf16 %v483
        %v508 = vunpack.c.h.bf16 %v483
        %v509 = vunpack.c.l.bf16 %v484
        %v510 = vunpack.c.h.bf16 %v484
        %v511 = vunpack.c.l.bf16 %v485
        %v512 = vunpack.c.h.bf16 %v485
        %v513 = vunpack.c.l.bf16 %v486
        %v514 = vunpack.c.h.bf16 %v486
        %v515 = vunpack.c.l.bf16 %v487
        %v516 = vunpack.c.h.bf16 %v487
        %v517 = vunpack.c.l.bf16 %v488
        %v518 = vunpack.c.h.bf16 %v488
        %v519 = vunpack.c.l.bf16 %v489
        %v520 = vunpack.c.h.bf16 %v489
        %v521 = vunpack.c.l.bf16 %v490
        %v522 = vunpack.c.h.bf16 %v490
        %vm523 = vcmask 64512
        %v525 = vsel %vm523, %v461, 0
        %v528 = vsel %vm523, %v462, 0
        %v531 = vsel %vm523, %v463, 0
        %v534 = vsel %vm523, %v464, 0
        %v537 = vsel %vm523, %v465, 0
        %v540 = vsel %vm523, %v466, 0
        %v543 = vsel %vm523, %v467, 0
        %v546 = vsel %vm523, %v468, 0
        %548 = vmatprep.subr.mxu0 %v472
        %549 = vmatpush1.msra.mxu0 %v471
        %550 = vmatprep.subr.mxu0 0.0
        %551 = vmatpush1.msra.mxu0 0.0
        %552 = vmatprep.subr.mxu0 0.0
        %553 = vmatpush1.msra.mxu0 0.0
        %554 = vmatprep.subr.mxu0 0.0
        %555 = vmatpush1.msra.mxu0 0.0
        %556 = vmatprep.subr.mxu0 0.0
        %557 = vmatpush1.msra.mxu0 0.0
        %558 = vmatprep.subr.mxu0 0.0
        %559 = vmatpush1.msra.mxu0 0.0
        %560 = vmatprep.subr.mxu0 0.0
        %561 = vmatpush1.msra.mxu0 0.0
        %562 = vmatprep.subr.mxu0 0.0
        %563 = vmatpush1.msra.mxu0 0.0
        %564 = vmatprep.subr.mxu0 0.0
        %565 = vmatpush1.msra.mxu0 0.0
        %566 = vmatprep.subr.mxu0 0.0
        %567 = vmatpush1.msra.mxu0 0.0
        %568 = vmatprep.subr.mxu0 0.0
        %569 = vmatpush1.msra.mxu0 0.0
        %570 = vmatprep.subr.mxu0 0.0
        %571 = vmatpush1.msra.mxu0 0.0
        %572 = vmatprep.subr.mxu0 0.0
        %573 = vmatpush1.msra.mxu0 0.0
        %574 = vmatprep.subr.mxu0 0.0
        %575 = vmatpush1.msra.mxu0 0.0
        %576 = vmatprep.subr.mxu0 0.0
        %577 = vmatpush1.msra.mxu0 0.0
        %578 = vmatprep.subr.mxu0 0.0
        %579 = vmatpush1.msra.mxu0 0.0
        %580 = vmatprep.subr.mxu0 0.0
        %581 = vmatpush1.msra.mxu0 0.0
        %582 = vmatprep.subr.mxu0 0.0
        %583 = vmatpush1.msra.mxu0 0.0
        %584 = vmatprep.subr.mxu0 0.0
        %585 = vmatpush1.msra.mxu0 0.0
        %586 = vmatprep.subr.mxu0 0.0
        %587 = vmatpush1.msra.mxu0 0.0
        %588 = vmatprep.subr.mxu0 0.0
        %589 = vmatpush1.msra.mxu0 0.0
        %590 = vmatprep.subr.mxu0 0.0
        %591 = vmatpush1.msra.mxu0 0.0
        %592 = vmatprep.subr.mxu0 0.0
        %593 = vmatpush1.msra.mxu0 0.0
        %594 = vmatprep.subr.mxu0 0.0
        %595 = vmatpush1.msra.mxu0 0.0
        %596 = vmatprep.subr.mxu0 0.0
        %597 = vmatpush1.msra.mxu0 0.0
        %598 = vmatprep.subr.mxu0 0.0
        %599 = vmatpush1.msra.mxu0 0.0
        %600 = vmatprep.subr.mxu0 0.0
        %601 = vmatpush1.msra.mxu0 0.0
        %602 = vmatprep.subr.mxu0 0.0
        %603 = vmatpush1.msra.mxu0 0.0
        %604 = vmatprep.subr.mxu0 0.0
        %605 = vmatpush1.msra.mxu0 0.0
        %606 = vmatprep.subr.mxu0 0.0
        %607 = vmatpush1.msra.mxu0 0.0
        %608 = vmatprep.subr.mxu0 0.0
        %609 = vmatpush1.msra.mxu0 0.0
        %610 = vmatprep.subr.mxu0 0.0
        %611 = vmatpush1.msra.mxu0 0.0
        %612 = vmatprep.mubr.f32.mxu0 0.0
        %613 = vmatmul.mubr.f32.gmra.mrb[0].mxu0 %v525
        %v614 = vpop.f32.mrb[0].mxu0
        %v615 = vadd.f32 %v491, %v614
        %v616 = vpop.f32.mrb[0].mxu0
        %v617 = vadd.f32 %v492, %v616
        %618 = vmatprep.mubr.f32.mxu0 0.0
        %619 = vmatmul.mubr.f32.gmra.mrb[0].mxu0 %v528
        %v620 = vpop.f32.mrb[0].mxu0
        %v621 = vadd.f32 %v495, %v620
        %v622 = vpop.f32.mrb[0].mxu0
        %v623 = vadd.f32 %v496, %v622
        %624 = vmatprep.mubr.f32.mxu0 0.0
        %625 = vmatmul.mubr.f32.gmra.mrb[0].mxu0 %v531
        %v626 = vpop.f32.mrb[0].mxu0
        %v627 = vadd.f32 %v499, %v626
        %v628 = vpop.f32.mrb[0].mxu0
        %v629 = vadd.f32 %v500, %v628
        %630 = vmatprep.mubr.f32.mxu0 0.0
        %631 = vmatmul.mubr.f32.gmra.mrb[0].mxu0 %v534
        %v632 = vpop.f32.mrb[0].mxu0
        %v633 = vadd.f32 %v503, %v632
        %v634 = vpop.f32.mrb[0].mxu0
        %v635 = vadd.f32 %v504, %v634
        %636 = vmatprep.mubr.f32.mxu0 0.0
        %637 = vmatmul.mubr.f32.gmra.mrb[0].mxu0 %v537
        %v638 = vpop.f32.mrb[0].mxu0
        %v639 = vadd.f32 %v507, %v638
        %v640 = vpop.f32.mrb[0].mxu0
        %v641 = vadd.f32 %v508, %v640
        %642 = vmatprep.mubr.f32.mxu0 0.0
        %643 = vmatmul.mubr.f32.gmra.mrb[0].mxu0 %v540
        %v644 = vpop.f32.mrb[0].mxu0
        %v645 = vadd.f32 %v511, %v644
        %v646 = vpop.f32.mrb[0].mxu0
        %v647 = vadd.f32 %v512, %v646
        %648 = vmatprep.mubr.f32.mxu0 0.0
        %649 = vmatmul.mubr.f32.gmra.mrb[0].mxu0 %v543
        %v650 = vpop.f32.mrb[0].mxu0
        %v651 = vadd.f32 %v515, %v650
        %v652 = vpop.f32.mrb[0].mxu0
        %v653 = vadd.f32 %v516, %v652
        %654 = vmatprep.mubr.f32.mxu0 0.0
        %655 = vmatmul.mubr.f32.gmra.mrb[0].mxu0 %v546
        %v656 = vpop.f32.mrb[0].mxu0
        %v657 = vadd.f32 %v519, %v656
        %v658 = vpop.f32.mrb[0].mxu0
        %v659 = vadd.f32 %v520, %v658
        %660 = vdwg.mxu0
        %661 = vmatprep.subr.mxu0 %v474
        %662 = vmatpush1.msra.mxu0 %v473
        %663 = vmatprep.subr.mxu0 0.0
        %664 = vmatpush1.msra.mxu0 0.0
        %665 = vmatprep.subr.mxu0 0.0
        %666 = vmatpush1.msra.mxu0 0.0
        %667 = vmatprep.subr.mxu0 0.0
        %668 = vmatpush1.msra.mxu0 0.0
        %669 = vmatprep.subr.mxu0 0.0
        %670 = vmatpush1.msra.mxu0 0.0
        %671 = vmatprep.subr.mxu0 0.0
        %672 = vmatpush1.msra.mxu0 0.0
        %673 = vmatprep.subr.mxu0 0.0
        %674 = vmatpush1.msra.mxu0 0.0
        %675 = vmatprep.subr.mxu0 0.0
        %676 = vmatpush1.msra.mxu0 0.0
        %677 = vmatprep.subr.mxu0 0.0
        %678 = vmatpush1.msra.mxu0 0.0
        %679 = vmatprep.subr.mxu0 0.0
        %680 = vmatpush1.msra.mxu0 0.0
        %681 = vmatprep.subr.mxu0 0.0
        %682 = vmatpush1.msra.mxu0 0.0
        %683 = vmatprep.subr.mxu0 0.0
        %684 = vmatpush1.msra.mxu0 0.0
        %685 = vmatprep.subr.mxu0 0.0
        %686 = vmatpush1.msra.mxu0 0.0
        %687 = vmatprep.subr.mxu0 0.0
        %688 = vmatpush1.msra.mxu0 0.0
        %689 = vmatprep.subr.mxu0 0.0
        %690 = vmatpush1.msra.mxu0 0.0
        %691 = vmatprep.subr.mxu0 0.0
        %692 = vmatpush1.msra.mxu0 0.0
        %693 = vmatprep.subr.mxu0 0.0
        %694 = vmatpush1.msra.mxu0 0.0
        %695 = vmatprep.subr.mxu0 0.0
        %696 = vmatpush1.msra.mxu0 0.0
        %697 = vmatprep.subr.mxu0 0.0
        %698 = vmatpush1.msra.mxu0 0.0
        %699 = vmatprep.subr.mxu0 0.0
        %700 = vmatpush1.msra.mxu0 0.0
        %701 = vmatprep.subr.mxu0 0.0
        %702 = vmatpush1.msra.mxu0 0.0
        %703 = vmatprep.subr.mxu0 0.0
        %704 = vmatpush1.msra.mxu0 0.0
        %705 = vmatprep.subr.mxu0 0.0
        %706 = vmatpush1.msra.mxu0 0.0
        %707 = vmatprep.subr.mxu0 0.0
        %708 = vmatpush1.msra.mxu0 0.0
        %709 = vmatprep.subr.mxu0 0.0
        %710 = vmatpush1.msra.mxu0 0.0
        %711 = vmatprep.subr.mxu0 0.0
        %712 = vmatpush1.msra.mxu0 0.0
        %713 = vmatprep.subr.mxu0 0.0
        %714 = vmatpush1.msra.mxu0 0.0
        %715 = vmatprep.subr.mxu0 0.0
        %716 = vmatpush1.msra.mxu0 0.0
        %717 = vmatprep.subr.mxu0 0.0
        %718 = vmatpush1.msra.mxu0 0.0
        %719 = vmatprep.subr.mxu0 0.0
        %720 = vmatpush1.msra.mxu0 0.0
        %721 = vmatprep.subr.mxu0 0.0
        %722 = vmatpush1.msra.mxu0 0.0
        %723 = vmatprep.subr.mxu0 0.0
        %724 = vmatpush1.msra.mxu0 0.0
        %725 = vmatprep.mubr.f32.mxu0 0.0
        %726 = vmatmul.mubr.f32.gmra.mrb[0].mxu0 %v525
        %v727 = vpop.f32.mrb[0].mxu0
        %v728 = vadd.f32 %v493, %v727
        %v729 = vpop.f32.mrb[0].mxu0
        %v730 = vadd.f32 %v494, %v729
        %731 = vmatprep.mubr.f32.mxu0 0.0
        %732 = vmatmul.mubr.f32.gmra.mrb[0].mxu0 %v528
        %v733 = vpop.f32.mrb[0].mxu0
        %v734 = vadd.f32 %v497, %v733
        %v735 = vpop.f32.mrb[0].mxu0
        %v736 = vadd.f32 %v498, %v735
        %737 = vmatprep.mubr.f32.mxu0 0.0
        %738 = vmatmul.mubr.f32.gmra.mrb[0].mxu0 %v531
        %v739 = vpop.f32.mrb[0].mxu0
        %v740 = vadd.f32 %v501, %v739
        %v741 = vpop.f32.mrb[0].mxu0
        %v742 = vadd.f32 %v502, %v741
        %743 = vmatprep.mubr.f32.mxu0 0.0
        %744 = vmatmul.mubr.f32.gmra.mrb[0].mxu0 %v534
        %v745 = vpop.f32.mrb[0].mxu0
        %v746 = vadd.f32 %v505, %v745
        %v747 = vpop.f32.mrb[0].mxu0
        %v748 = vadd.f32 %v506, %v747
        %749 = vmatprep.mubr.f32.mxu0 0.0
        %750 = vmatmul.mubr.f32.gmra.mrb[0].mxu0 %v537
        %v751 = vpop.f32.mrb[0].mxu0
        %v752 = vadd.f32 %v509, %v751
        %v753 = vpop.f32.mrb[0].mxu0
        %v754 = vadd.f32 %v510, %v753
        %755 = vmatprep.mubr.f32.mxu0 0.0
        %756 = vmatmul.mubr.f32.gmra.mrb[0].mxu0 %v540
        %v757 = vpop.f32.mrb[0].mxu0
        %v758 = vadd.f32 %v513, %v757
        %v759 = vpop.f32.mrb[0].mxu0
        %v760 = vadd.f32 %v514, %v759
        %761 = vmatprep.mubr.f32.mxu0 0.0
        %762 = vmatmul.mubr.f32.gmra.mrb[0].mxu0 %v543
        %v763 = vpop.f32.mrb[0].mxu0
        %v764 = vadd.f32 %v517, %v763
        %v765 = vpop.f32.mrb[0].mxu0
        %v766 = vadd.f32 %v518, %v765
        %767 = vmatprep.mubr.f32.mxu0 0.0
        %768 = vmatmul.mubr.f32.gmra.mrb[0].mxu0 %v546
        %v769 = vpop.f32.mrb[0].mxu0
        %v770 = vadd.f32 %v521, %v769
        %v771 = vpop.f32.mrb[0].mxu0
        %v772 = vadd.f32 %v522, %v771
        %773 = vdwg.mxu0
        %v774 = vpack.c.bf16 %v621, %v615
        %v775 = vpack.c.bf16 %v623, %v617
        %v776 = vpack.c.bf16 %v734, %v728
        %v777 = vpack.c.bf16 %v736, %v730
        %v778 = vpack.c.bf16 %v633, %v627
        %v779 = vpack.c.bf16 %v635, %v629
        %v780 = vpack.c.bf16 %v746, %v740
        %v781 = vpack.c.bf16 %v748, %v742
        %v782 = vpack.c.bf16 %v645, %v639
        %v783 = vpack.c.bf16 %v647, %v641
        %v784 = vpack.c.bf16 %v758, %v752
        %v785 = vpack.c.bf16 %v760, %v754
        %v786 = vpack.c.bf16 %v657, %v651
        %v787 = vpack.c.bf16 %v659, %v653
        %v788 = vpack.c.bf16 %v770, %v764
        %v789 = vpack.c.bf16 %v772, %v766
        %v806 = vunpack.c.l.b16 %v774
        %v807 = vunpack.c.l.b16 %v775
        %v808 = vunpack.c.l.b16 %v776
        %v809 = vunpack.c.l.b16 %v777
        %v810 = vunpack.c.h.b16 %v774
        %v811 = vunpack.c.h.b16 %v775
        %v812 = vunpack.c.h.b16 %v776
        %v813 = vunpack.c.h.b16 %v777
        %v814 = vunpack.c.l.b16 %v778
        %v815 = vunpack.c.l.b16 %v779
        %v816 = vunpack.c.l.b16 %v780
        %v817 = vunpack.c.l.b16 %v781
        %v818 = vunpack.c.h.b16 %v778
        %v819 = vunpack.c.h.b16 %v779
        %v820 = vunpack.c.h.b16 %v780
        %v821 = vunpack.c.h.b16 %v781
        %v822 = vunpack.c.l.b16 %v782
        %v823 = vunpack.c.l.b16 %v783
        %v824 = vunpack.c.l.b16 %v784
        %v825 = vunpack.c.l.b16 %v785
        %v826 = vunpack.c.h.b16 %v782
        %v827 = vunpack.c.h.b16 %v783
        %v828 = vunpack.c.h.b16 %v784
        %v829 = vunpack.c.h.b16 %v785
        %v830 = vunpack.c.l.b16 %v786
        %v831 = vunpack.c.l.b16 %v787
        %v832 = vunpack.c.l.b16 %v788
        %v833 = vunpack.c.l.b16 %v789
        %v834 = vunpack.c.h.b16 %v786
        %v835 = vunpack.c.h.b16 %v787
        %v836 = vunpack.c.h.b16 %v788
        %v837 = vunpack.c.h.b16 %v789
        %v838 = vpack.c.b16 %v807, %v806
        %v839 = vpack.c.b16 %v809, %v808
        %v840 = vpack.c.b16 %v811, %v810
        %v841 = vpack.c.b16 %v813, %v812
        %v842 = vpack.c.b16 %v815, %v814
        %v843 = vpack.c.b16 %v817, %v816
        %v844 = vpack.c.b16 %v819, %v818
        %v845 = vpack.c.b16 %v821, %v820
        %v846 = vpack.c.b16 %v823, %v822
        %v847 = vpack.c.b16 %v825, %v824
        %v848 = vpack.c.b16 %v827, %v826
        %v849 = vpack.c.b16 %v829, %v828
        %v850 = vpack.c.b16 %v831, %v830
        %v851 = vpack.c.b16 %v833, %v832
        %v852 = vpack.c.b16 %v835, %v834
        %v853 = vpack.c.b16 %v837, %v836
        %870 = vst [vmem:[%s340] sm:$0xff] %v838
        %871 = vst [vmem:[%s340 + $0x8] sm:$0xff] %v839
        %872 = vst [vmem:[%s340 + $0x10] sm:$0xff] %v840
        %873 = vst [vmem:[%s340 + $0x18] sm:$0xff] %v841
        %874 = vst [vmem:[%s340 + $0x20] sm:$0xff] %v842
        %875 = vst [vmem:[%s340 + $0x28] sm:$0xff] %v843
        %876 = vst [vmem:[%s340 + $0x30] sm:$0xff] %v844
        %877 = vst [vmem:[%s340 + $0x38] sm:$0xff] %v845
        %878 = vst [vmem:[%s340 + $0x40] sm:$0xff] %v846
        %879 = vst [vmem:[%s340 + $0x48] sm:$0xff] %v847
        %880 = vst [vmem:[%s340 + $0x50] sm:$0xff] %v848
        %881 = vst [vmem:[%s340 + $0x58] sm:$0xff] %v849
        %882 = vst [vmem:[%s340 + $0x60] sm:$0xff] %v850
        %883 = vst [vmem:[%s340 + $0x68] sm:$0xff] %v851
        %884 = vst [vmem:[%s340 + $0x70] sm:$0xff] %v852
        %885 = vst [vmem:[%s340 + $0x78] sm:$0xff] %v853
        %s886 = sand.u32 %s193, 1
        %s887 = scalar_lea.sflag [#allocation5], %s886
        %s888 = sand.u32 %s193, 1
        %s889 = smul.addr %s888, 128
        %s890 = scalar_lea.vmem [#allocation8], %s889
        // Predicated region
        $region57: #{feature_block.1} parent=43 // pred_check
          %p891 = pneg %p203
        $region58: #{feature_block.1} parent=43 // pred_check_branch
          %893 = sbr.rel (%p891) target = $region60
        $region59: #{feature_block.1} parent=43 // pred_region
          %s894 = smul.u32 4, %s31
          %s896 = ssub.s32 2048, 2048
          %897 = vsyncadd %s887, %s896
          %s898 = smul.addr %s30, 256
          %s899 = sadd.s32 %s894, %s898
          %s900 = smul.addr %s899, 64
          %s901 = scalar_lea.hbm %s6, %s900
          %s902 = sshll.u32 %s890, 4
          %s903 = int_to_ptr.vmem [resolvable:$true] %s902
          %908 = dma.vmem_to_hbm [thread:$0]  %s903, 2048, %s901, %s887, 256, 2048, 16
        $region60: #{feature_block.1} parent=43 // pred_fallthru
          _
      $region44: #{feature_block.1} parent=5 // pred_fallthru
        _
      %p909 = scmp.le.s32.totalorder 2, %s21
      // Predicated region
      $region61: #{feature_block.1} parent=5 // pred_check
        %p910 = pneg %p909
      $region62: #{feature_block.1} parent=5 // pred_check_branch
        %912 = sbr.rel (%p910) target = $region64
      $region63: #{feature_block.1} parent=5 // pred_region
        %s913 = ssub.s32 %s21, 2
        // Predicated region
        $region65: #{feature_block.1} parent=63 // pred_check
          %p914 = pneg %p209
        $region66: #{feature_block.1} parent=63 // pred_check_branch
          %916 = sbr.rel (%p914) target = $region68
        $region67: #{feature_block.1} parent=63 // pred_region
          %s917 = sand.u32 %s194, 1
          %s918 = scalar_lea.sflag [#allocation5], %s917
          %s919 = sand.u32 %s194, 1
          %s920 = smul.addr %s919, 128
          %s921 = scalar_lea.vmem [#allocation8], %s920
          %922 = dma.done %s918, 2048
        $region68: #{feature_block.1} parent=63 // pred_fallthru
          _
      $region64: #{feature_block.1} parent=5 // pred_fallthru
        _
    $region6: #{feature_block.1} parent=1 // loop_footer
      %s25 = sadd.s32 1, %s21
    $region7: #{feature_block.1} parent=1 // loop_footer_branch
      %20 = sbr.rel target = $region3
    $region8: #{feature_block.1} parent=1 // loop_exit
      _
    %923 = vsyncpa [#allocation4], 1
    %s924 = scalar_lea.sflag [#allocation4], 1
    %925 = vsyncpa %s924, 1
    %926 = vsyncpa [#allocation7], 1
    %s927 = scalar_lea.sflag [#allocation7], 1
    %928 = vsyncpa %s927, 1
    %929 = vsyncpa [#allocation5], 1
    %s930 = scalar_lea.sflag [#allocation5], 1
    %931 = vsyncpa %s930, 1

</llo_original>
